<compile_context>
chip_gen: v5e
topology: v5e:2x2
jax: 0.10.0
libtpu: 0.0.40
codegen_flags: <defaults>
</compile_context>

<pallas_src>
import jax
import jax.numpy as jnp
from jax.experimental import pallas as pl
from jax.experimental.pallas import tpu as pltpu

HIDDEN = 32  # logical hidden size of the module


# ---------------- fused Pallas kernel ----------------

def fused_edgeconv_kernel(x_ref, e_ref, idx_ref, we_ref, wn_ref, vec_ref, xo_ref, eo_ref):
    f32 = jnp.float32
    N, H = x_ref.shape
    E = e_ref.shape[0]

    x = x_ref[...]          # [N, H] f32
    e = e_ref[...]          # [E, H] f32

    # ---- in-kernel gather of x[src], x[dst]: one-hot tiles built from iota == index ----
    # idx_ref is [2E, 1] int32: rows [0, E) = src, rows [E, 2E) = dst (sublane-aligned slices).
    node_ids = jax.lax.broadcasted_iota(jnp.int32, (E, N), 1)
    src_col = idx_ref[0:E, :]            # [E, 1]
    dst_col = idx_ref[E:2 * E, :]        # [E, 1]
    g_src = (node_ids == src_col).astype(f32)   # [E, N]
    g_dst = (node_ids == dst_col).astype(f32)   # [E, N]

    x_src = jnp.dot(g_src, x, preferred_element_type=f32)   # [E, H] (exact row selection)
    x_dst = jnp.dot(g_dst, x, preferred_element_type=f32)   # [E, H]

    # ---- edge MLP: ReLU([x_src | x_dst | e] @ W_e + b_e) without the concat ----
    y = jnp.dot(x_src, we_ref[0:H, :], preferred_element_type=f32)
    y = y + jnp.dot(x_dst, we_ref[H:2 * H, :], preferred_element_type=f32)
    y = y + jnp.dot(e, we_ref[2 * H:3 * H, :], preferred_element_type=f32)
    msg = jnp.maximum(y + vec_ref[0:1, :], 0.0)              # [E, H] (new edge_attr, pre-LN)

    # ---- scatter-sum onto dst nodes: agg = g_dst^T @ msg (reuses g_dst, no [N,E] one-hot) ----
    agg = jax.lax.dot_general(g_dst, msg, (((0,), (0,)), ((), ())),
                              preferred_element_type=f32)    # [N, H]

    # ---- node MLP: ReLU([x | agg] @ W_n + b_n) without the concat ----
    z = jnp.dot(x, wn_ref[0:H, :], preferred_element_type=f32)
    z = z + jnp.dot(agg, wn_ref[H:2 * H, :], preferred_element_type=f32)
    x_new = jnp.maximum(z + vec_ref[1:2, :], 0.0)            # [N, H] (new x, pre-LN)

    # ---- fused LayerNorm epilogue (all H lanes valid -> no masking needed) ----
    def layer_norm(t, gamma, beta):
        mean = jnp.mean(t, axis=-1, keepdims=True)
        cen = t - mean
        var = jnp.mean(cen * cen, axis=-1, keepdims=True)
        return cen * jax.lax.rsqrt(var + 1e-5) * gamma + beta   # eps matches nn.LayerNorm

    eo_ref[...] = layer_norm(msg, vec_ref[2:3, :], vec_ref[3:4, :]).astype(eo_ref.dtype)
    xo_ref[...] = layer_norm(x_new, vec_ref[4:5, :], vec_ref[5:6, :]).astype(xo_ref.dtype)
    # Dropout(0.2) is identity in eval mode.


# ---------------- parameter packing (done once, outside the hot path) ----------------

def pack_params(p, hidden=HIDDEN):
    """Keep weights f32/unpadded; stack bias + LN vectors into one [8, H] ref (single DMA)."""
    H = hidden
    vecs = jnp.zeros((8, H), jnp.float32)
    rows = [p["b_edge"], p["b_node"],
            p["ln_e_gamma"], p["ln_e_beta"],
            p["ln_x_gamma"], p["ln_x_beta"]]
    for i, r in enumerate(rows):
        vecs = vecs.at[i, :].set(r.astype(jnp.float32))
    return {
        "w_edge": p["w_edge"].astype(jnp.float32),   # [3H, H]
        "w_node": p["w_node"].astype(jnp.float32),   # [2H, H]
        "vecs": vecs,                                # [8, H]
    }


# ---------------- forward wrapper (single pallas_call, 6 inputs, no pad/slice around it) ----------------

def edge_conv_batch_forward(packed, x, edge_index, edge_attr):
    N, H = x.shape
    E = edge_attr.shape[0]

    # edge_index is [2, E] (row 0 = src, row 1 = dst) -> one [2E, 1] int32 ref.
    idx = edge_index.astype(jnp.int32).reshape(2 * E, 1)

    vmem = pl.BlockSpec(memory_space=pltpu.MemorySpace.VMEM)
    x_out, e_out = pl.pallas_call(
        fused_edgeconv_kernel,
        out_shape=(jax.ShapeDtypeStruct((N, H), jnp.float32),
                   jax.ShapeDtypeStruct((E, H), jnp.float32)),
        in_specs=[vmem] * 6,
        out_specs=(vmem, vmem),
    )(x, edge_attr, idx, packed["w_edge"], packed["w_node"], packed["vecs"])

    return x_out, e_out


# ---------------- pure-JAX reference (for a sanity check) ----------------

def reference_forward(p, x, edge_index, edge_attr, eps=1e-5):
    src, dst = edge_index[0], edge_index[1]
    edge_in = jnp.concatenate([x[src], x[dst], edge_attr], axis=-1)
    msg = jax.nn.relu(edge_in @ p["w_edge"] + p["b_edge"])
    agg = jax.ops.segment_sum(msg, dst, num_segments=x.shape[0])
    node_in = jnp.concatenate([x, agg], axis=-1)
    x_new = jax.nn.relu(node_in @ p["w_node"] + p["b_node"])

    def ln(t, g, b):
        m = t.mean(-1, keepdims=True)
        v = ((t - m) ** 2).mean(-1, keepdims=True)
        return (t - m) * jax.lax.rsqrt(v + eps) * g + b

    return (ln(x_new, p["ln_x_gamma"], p["ln_x_beta"]),
            ln(msg, p["ln_e_gamma"], p["ln_e_beta"]))


if __name__ == "__main__":
    key = jax.random.PRNGKey(0)
    ks = jax.random.split(key, 6)

    N, E, H = 8, 16, HIDDEN
    x = jax.random.normal(ks[0], (N, H), jnp.float32)
    edge_attr = jax.random.normal(ks[1], (E, H), jnp.float32)
    src = jax.random.randint(ks[2], (E,), 0, N, dtype=jnp.int32)
    dst = jax.random.randint(ks[3], (E,), 0, N, dtype=jnp.int32)
    edge_index = jnp.stack([src, dst])

    raw_params = dict(
        w_edge=0.1 * jax.random.normal(ks[4], (3 * H, H), jnp.float32),
        b_edge=jnp.zeros((H,), jnp.float32),
        w_node=0.1 * jax.random.normal(ks[5], (2 * H, H), jnp.float32),
        b_node=jnp.zeros((H,), jnp.float32),
        ln_x_gamma=jnp.ones((H,), jnp.float32),
        ln_x_beta=jnp.zeros((H,), jnp.float32),
        ln_e_gamma=jnp.ones((H,), jnp.float32),
        ln_e_beta=jnp.zeros((H,), jnp.float32),
    )
    packed = pack_params(raw_params)

    fwd = jax.jit(edge_conv_batch_forward)
    out_x, out_edge_attr = fwd(packed, x, edge_index, edge_attr)
    jax.block_until_ready((out_x, out_edge_attr))

    ref_x, ref_e = reference_forward(raw_params, x, edge_index, edge_attr)
    assert out_x.shape == (N, H) and out_edge_attr.shape == (E, H)
    assert jnp.allclose(out_x, ref_x, atol=2e-2, rtol=2e-2), "node output mismatch"
    assert jnp.allclose(out_edge_attr, ref_e, atol=2e-2, rtol=2e-2), "edge output mismatch"
    print("KERNEL_OK")
</pallas_src>

<mosaic_0001>
module attributes {stable_mosaic.version = 11 : i64} {
  func.func @fused_edgeconv_kernel(%arg0: memref<8x32xf32, #tpu.memory_space<vmem>>, %arg1: memref<16x32xf32, #tpu.memory_space<vmem>>, %arg2: memref<32x1xi32, #tpu.memory_space<vmem>>, %arg3: memref<96x32xf32, #tpu.memory_space<vmem>>, %arg4: memref<64x32xf32, #tpu.memory_space<vmem>>, %arg5: memref<8x32xf32, #tpu.memory_space<vmem>>, %arg6: memref<8x32xf32, #tpu.memory_space<vmem>>, %arg7: memref<16x32xf32, #tpu.memory_space<vmem>>) attributes {dimension_semantics = [], scalar_prefetch = 0 : i64, scratch_operands = 0 : i64, tpu.core_type = #tpu.core_type<tc>} {
    %c0 = arith.constant 0 : index
    %c0_0 = arith.constant 0 : index
    %0 = vector.load %arg0[%c0, %c0_0] : memref<8x32xf32, #tpu.memory_space<vmem>>, vector<8x32xf32>
    %c0_1 = arith.constant 0 : index
    %c0_2 = arith.constant 0 : index
    %1 = vector.load %arg1[%c0_1, %c0_2] : memref<16x32xf32, #tpu.memory_space<vmem>>, vector<16x32xf32>
    %2 = tpu.iota {dimensions = array<i32: 1>} : vector<16x8xi32>
    %c0_3 = arith.constant 0 : index
    %c0_4 = arith.constant 0 : index
    %3 = vector.load %arg2[%c0_3, %c0_4] : memref<32x1xi32, #tpu.memory_space<vmem>>, vector<16x1xi32>
    %c16 = arith.constant 16 : index
    %c0_5 = arith.constant 0 : index
    %4 = vector.load %arg2[%c16, %c0_5] : memref<32x1xi32, #tpu.memory_space<vmem>>, vector<16x1xi32>
    %5 = vector.broadcast %3 : vector<16x1xi32> to vector<16x8xi32>
    %6 = arith.cmpi eq, %2, %5 : vector<16x8xi32>
    %7 = arith.extui %6 : vector<16x8xi1> to vector<16x8xi32>
    %8 = arith.sitofp %7 : vector<16x8xi32> to vector<16x8xf32>
    %9 = vector.broadcast %4 : vector<16x1xi32> to vector<16x8xi32>
    %10 = arith.cmpi eq, %2, %9 : vector<16x8xi32>
    %11 = arith.extui %10 : vector<16x8xi1> to vector<16x8xi32>
    %12 = arith.sitofp %11 : vector<16x8xi32> to vector<16x8xf32>
    %cst = arith.constant dense<0.000000e+00> : vector<16x32xf32>
    %13 = tpu.matmul %8, %0, %cst {dimension_numbers = #tpu.dot_dimension_numbers<[1], [0], [0], [1], [0, 0, 1, 1], [], []>} : vector<16x8xf32>, vector<8x32xf32>, vector<16x32xf32> -> vector<16x32xf32>
    %cst_6 = arith.constant dense<0.000000e+00> : vector<16x32xf32>
    %14 = tpu.matmul %12, %0, %cst_6 {dimension_numbers = #tpu.dot_dimension_numbers<[1], [0], [0], [1], [0, 0, 1, 1], [], []>} : vector<16x8xf32>, vector<8x32xf32>, vector<16x32xf32> -> vector<16x32xf32>
    %c0_7 = arith.constant 0 : index
    %c0_8 = arith.constant 0 : index
    %15 = vector.load %arg3[%c0_7, %c0_8] : memref<96x32xf32, #tpu.memory_space<vmem>>, vector<32x32xf32>
    %cst_9 = arith.constant dense<0.000000e+00> : vector<16x32xf32>
    %16 = tpu.matmul %13, %15, %cst_9 {dimension_numbers = #tpu.dot_dimension_numbers<[1], [0], [0], [1], [0, 0, 1, 1], [], []>} : vector<16x32xf32>, vector<32x32xf32>, vector<16x32xf32> -> vector<16x32xf32>
    %c32 = arith.constant 32 : index
    %c0_10 = arith.constant 0 : index
    %17 = vector.load %arg3[%c32, %c0_10] : memref<96x32xf32, #tpu.memory_space<vmem>>, vector<32x32xf32>
    %cst_11 = arith.constant dense<0.000000e+00> : vector<16x32xf32>
    %18 = tpu.matmul %14, %17, %cst_11 {dimension_numbers = #tpu.dot_dimension_numbers<[1], [0], [0], [1], [0, 0, 1, 1], [], []>} : vector<16x32xf32>, vector<32x32xf32>, vector<16x32xf32> -> vector<16x32xf32>
    %19 = arith.addf %16, %18 : vector<16x32xf32>
    %c64 = arith.constant 64 : index
    %c0_12 = arith.constant 0 : index
    %20 = vector.load %arg3[%c64, %c0_12] : memref<96x32xf32, #tpu.memory_space<vmem>>, vector<32x32xf32>
    %cst_13 = arith.constant dense<0.000000e+00> : vector<16x32xf32>
    %21 = tpu.matmul %1, %20, %cst_13 {dimension_numbers = #tpu.dot_dimension_numbers<[1], [0], [0], [1], [0, 0, 1, 1], [], []>} : vector<16x32xf32>, vector<32x32xf32>, vector<16x32xf32> -> vector<16x32xf32>
    %22 = arith.addf %19, %21 : vector<16x32xf32>
    %c0_14 = arith.constant 0 : index
    %c0_15 = arith.constant 0 : index
    %23 = vector.load %arg5[%c0_14, %c0_15] : memref<8x32xf32, #tpu.memory_space<vmem>>, vector<1x32xf32>
    %24 = vector.broadcast %23 : vector<1x32xf32> to vector<16x32xf32>
    %25 = arith.addf %22, %24 : vector<16x32xf32>
    %cst_16 = arith.constant 0.000000e+00 : f32
    %26 = vector.broadcast %cst_16 : f32 to vector<16x32xf32>
    %27 = arith.maximumf %25, %26 : vector<16x32xf32>
    %cst_17 = arith.constant dense<0.000000e+00> : vector<8x32xf32>
    %28 = tpu.matmul %12, %27, %cst_17 {dimension_numbers = #tpu.dot_dimension_numbers<[0], [0], [1], [1], [0, 1, 1, 1], [], []>} : vector<16x8xf32>, vector<16x32xf32>, vector<8x32xf32> -> vector<8x32xf32>
    %c0_18 = arith.constant 0 : index
    %c0_19 = arith.constant 0 : index
    %29 = vector.load %arg4[%c0_18, %c0_19] : memref<64x32xf32, #tpu.memory_space<vmem>>, vector<32x32xf32>
    %cst_20 = arith.constant dense<0.000000e+00> : vector<8x32xf32>
    %30 = tpu.matmul %0, %29, %cst_20 {dimension_numbers = #tpu.dot_dimension_numbers<[1], [0], [0], [1], [0, 0, 1, 1], [], []>} : vector<8x32xf32>, vector<32x32xf32>, vector<8x32xf32> -> vector<8x32xf32>
    %c32_21 = arith.constant 32 : index
    %c0_22 = arith.constant 0 : index
    %31 = vector.load %arg4[%c32_21, %c0_22] : memref<64x32xf32, #tpu.memory_space<vmem>>, vector<32x32xf32>
    %cst_23 = arith.constant dense<0.000000e+00> : vector<8x32xf32>
    %32 = tpu.matmul %28, %31, %cst_23 {dimension_numbers = #tpu.dot_dimension_numbers<[1], [0], [0], [1], [0, 0, 1, 1], [], []>} : vector<8x32xf32>, vector<32x32xf32>, vector<8x32xf32> -> vector<8x32xf32>
    %33 = arith.addf %30, %32 : vector<8x32xf32>
    %c1 = arith.constant 1 : index
    %c0_24 = arith.constant 0 : index
    %34 = vector.load %arg5[%c1, %c0_24] : memref<8x32xf32, #tpu.memory_space<vmem>>, vector<1x32xf32>
    %35 = vector.broadcast %34 : vector<1x32xf32> to vector<8x32xf32>
    %36 = arith.addf %33, %35 : vector<8x32xf32>
    %cst_25 = arith.constant 0.000000e+00 : f32
    %37 = vector.broadcast %cst_25 : f32 to vector<8x32xf32>
    %38 = arith.maximumf %36, %37 : vector<8x32xf32>
    %c2 = arith.constant 2 : index
    %c0_26 = arith.constant 0 : index
    %39 = vector.load %arg5[%c2, %c0_26] : memref<8x32xf32, #tpu.memory_space<vmem>>, vector<1x32xf32>
    %c3 = arith.constant 3 : index
    %c0_27 = arith.constant 0 : index
    %40 = vector.load %arg5[%c3, %c0_27] : memref<8x32xf32, #tpu.memory_space<vmem>>, vector<1x32xf32>
    %cst_28 = arith.constant dense<0.000000e+00> : vector<16xf32>
    %41 = vector.multi_reduction <add>, %27, %cst_28 [1] : vector<16x32xf32> to vector<16xf32>
    %42 = vector.shape_cast %41 : vector<16xf32> to vector<16x1xf32>
    %cst_29 = arith.constant 3.200000e+01 : f32
    %43 = vector.broadcast %cst_29 : f32 to vector<16x1xf32>
    %44 = arith.divf %42, %43 : vector<16x1xf32>
    %45 = vector.broadcast %44 : vector<16x1xf32> to vector<16x32xf32>
    %46 = arith.subf %27, %45 : vector<16x32xf32>
    %47 = arith.mulf %46, %46 : vector<16x32xf32>
    %cst_30 = arith.constant dense<0.000000e+00> : vector<16xf32>
    %48 = vector.multi_reduction <add>, %47, %cst_30 [1] : vector<16x32xf32> to vector<16xf32>
    %49 = vector.shape_cast %48 : vector<16xf32> to vector<16x1xf32>
    %cst_31 = arith.constant 3.200000e+01 : f32
    %50 = vector.broadcast %cst_31 : f32 to vector<16x1xf32>
    %51 = arith.divf %49, %50 : vector<16x1xf32>
    %cst_32 = arith.constant 9.99999974E-6 : f32
    %52 = vector.broadcast %cst_32 : f32 to vector<16x1xf32>
    %53 = arith.addf %51, %52 : vector<16x1xf32>
    %54 = math.rsqrt %53 : vector<16x1xf32>
    %55 = vector.broadcast %54 : vector<16x1xf32> to vector<16x32xf32>
    %56 = arith.mulf %46, %55 : vector<16x32xf32>
    %57 = vector.broadcast %39 : vector<1x32xf32> to vector<16x32xf32>
    %58 = arith.mulf %56, %57 : vector<16x32xf32>
    %59 = vector.broadcast %40 : vector<1x32xf32> to vector<16x32xf32>
    %60 = arith.addf %58, %59 : vector<16x32xf32>
    %c0_33 = arith.constant 0 : index
    %c0_34 = arith.constant 0 : index
    %61 = vector.load %arg7[%c0_33, %c0_34] : memref<16x32xf32, #tpu.memory_space<vmem>>, vector<16x32xf32>
    tpu.vector_store %arg7[%c0_33, %c0_34], %60 {strides = array<i32>} : memref<16x32xf32, #tpu.memory_space<vmem>>, vector<16x32xf32>,
    %c4 = arith.constant 4 : index
    %c0_35 = arith.constant 0 : index
    %62 = vector.load %arg5[%c4, %c0_35] : memref<8x32xf32, #tpu.memory_space<vmem>>, vector<1x32xf32>
    %c5 = arith.constant 5 : index
    %c0_36 = arith.constant 0 : index
    %63 = vector.load %arg5[%c5, %c0_36] : memref<8x32xf32, #tpu.memory_space<vmem>>, vector<1x32xf32>
    %cst_37 = arith.constant dense<0.000000e+00> : vector<8xf32>
    %64 = vector.multi_reduction <add>, %38, %cst_37 [1] : vector<8x32xf32> to vector<8xf32>
    %65 = vector.shape_cast %64 : vector<8xf32> to vector<8x1xf32>
    %cst_38 = arith.constant 3.200000e+01 : f32
    %66 = vector.broadcast %cst_38 : f32 to vector<8x1xf32>
    %67 = arith.divf %65, %66 : vector<8x1xf32>
    %68 = vector.broadcast %67 : vector<8x1xf32> to vector<8x32xf32>
    %69 = arith.subf %38, %68 : vector<8x32xf32>
    %70 = arith.mulf %69, %69 : vector<8x32xf32>
    %cst_39 = arith.constant dense<0.000000e+00> : vector<8xf32>
    %71 = vector.multi_reduction <add>, %70, %cst_39 [1] : vector<8x32xf32> to vector<8xf32>
    %72 = vector.shape_cast %71 : vector<8xf32> to vector<8x1xf32>
    %cst_40 = arith.constant 3.200000e+01 : f32
    %73 = vector.broadcast %cst_40 : f32 to vector<8x1xf32>
    %74 = arith.divf %72, %73 : vector<8x1xf32>
    %cst_41 = arith.constant 9.99999974E-6 : f32
    %75 = vector.broadcast %cst_41 : f32 to vector<8x1xf32>
    %76 = arith.addf %74, %75 : vector<8x1xf32>
    %77 = math.rsqrt %76 : vector<8x1xf32>
    %78 = vector.broadcast %77 : vector<8x1xf32> to vector<8x32xf32>
    %79 = arith.mulf %69, %78 : vector<8x32xf32>
    %80 = vector.broadcast %62 : vector<1x32xf32> to vector<8x32xf32>
    %81 = arith.mulf %79, %80 : vector<8x32xf32>
    %82 = vector.broadcast %63 : vector<1x32xf32> to vector<8x32xf32>
    %83 = arith.addf %81, %82 : vector<8x32xf32>
    %c0_42 = arith.constant 0 : index
    %c0_43 = arith.constant 0 : index
    %84 = vector.load %arg6[%c0_42, %c0_43] : memref<8x32xf32, #tpu.memory_space<vmem>>, vector<8x32xf32>
    tpu.vector_store %arg6[%c0_42, %c0_43], %83 {strides = array<i32>} : memref<8x32xf32, #tpu.memory_space<vmem>>, vector<8x32xf32>,
    return
  }
}

</mosaic_0001>

<llo_original>
// kernel: edge_conv_batch_forward.1
$region0: #{edge_conv_batch_forward.1}
  #allocation0 [shape = 'u32[]', space=smem, size = 0x4, offset = 0x4, fixed_abs, tag = 'smem constant byte address 0x4 - core index']
  #allocation1 [shape = 'u32[72,128]{1,0:T(1,128)}', space=vmem, size = 0x9000, scoped, tag = 'internal scratch']
  %s0 = inlined_call_operand.vmem [shape: f32[8,32], index: 0, kind: input, shape index: {}]
  %s1 = inlined_call_operand.vmem [shape: f32[16,32], index: 1, kind: input, shape index: {}]
  %s2 = inlined_call_operand.vmem [shape: s32[32,1], index: 2, kind: input, shape index: {}]
  %s3 = inlined_call_operand.vmem [shape: f32[96,32], index: 3, kind: input, shape index: {}]
  %s4 = inlined_call_operand.vmem [shape: f32[64,32], index: 4, kind: input, shape index: {}]
  %s5 = inlined_call_operand.vmem [shape: f32[8,32], index: 5, kind: input, shape index: {}]
  %s6 = inlined_call_operand.hbm [shape: f32[8,32], index: 6, kind: output, shape index: {0}]
  %s7 = inlined_call_operand.hbm [shape: f32[16,32], index: 7, kind: output, shape index: {1}]
  %8 = xla_tuple %s6, %s7
  %s9 = sld [smem:[#allocation0]]
  $region42: #{edge_conv_batch_forward.1} parent=0
    _
  %s11 = ssub.s32 1, %s9
  %s12 = scalar_select 0, %s11, %s9
  $region1: #{edge_conv_batch_forward.1} parent=0
    #allocation2 [shape = 'u8[4096]{0}', space=vmem, size = 0x1000, scoped, tag = 'output window, operand 0, single buffered']
    #allocation3 [shape = 's32[1]{0}', space=sflag, size = 0x4, scoped, tag = 'scoped memory for edge_conv_batch_forward.1']
    #allocation4 [shape = 'u8[8192]{0}', space=vmem, size = 0x2000, scoped, tag = 'output window, operand 1, single buffered']
    #allocation5 [shape = 's32[1]{0}', space=sflag, size = 0x4, scoped, tag = 'scoped memory for edge_conv_batch_forward.1']
    %13 = vsyncpa [#allocation3], 0
    %14 = vsyncpa [#allocation5], 0
    // Predicated region
    $region2: #{edge_conv_batch_forward.1} parent=1 // pred_check
      _
    $region3: #{edge_conv_batch_forward.1} parent=1 // pred_check_branch
      %16 = sbr.rel (0) target = $region5
    $region4: #{edge_conv_batch_forward.1} parent=1 // pred_region
      _
    $region5: #{edge_conv_batch_forward.1} parent=1 // pred_fallthru
      _
    // Predicated region
    $region6: #{edge_conv_batch_forward.1} parent=1 // pred_check
      _
    $region7: #{edge_conv_batch_forward.1} parent=1 // pred_check_branch
      %18 = sbr.rel (0) target = $region9
    $region8: #{edge_conv_batch_forward.1} parent=1 // pred_region
      _
    $region9: #{edge_conv_batch_forward.1} parent=1 // pred_fallthru
      _
    // Predicated region
    $region10: #{edge_conv_batch_forward.1} parent=1 // pred_check
      _
    $region11: #{edge_conv_batch_forward.1} parent=1 // pred_check_branch
      %20 = sbr.rel (0) target = $region13
    $region12: #{edge_conv_batch_forward.1} parent=1 // pred_region
      _
    $region13: #{edge_conv_batch_forward.1} parent=1 // pred_fallthru
      _
    // Predicated region
    $region14: #{edge_conv_batch_forward.1} parent=1 // pred_check
      _
    $region15: #{edge_conv_batch_forward.1} parent=1 // pred_check_branch
      %22 = sbr.rel (0) target = $region17
    $region16: #{edge_conv_batch_forward.1} parent=1 // pred_region
      _
    $region17: #{edge_conv_batch_forward.1} parent=1 // pred_fallthru
      _
    // Predicated region
    $region18: #{edge_conv_batch_forward.1} parent=1 // pred_check
      _
    $region19: #{edge_conv_batch_forward.1} parent=1 // pred_check_branch
      %24 = sbr.rel (0) target = $region21
    $region20: #{edge_conv_batch_forward.1} parent=1 // pred_region
      _
    $region21: #{edge_conv_batch_forward.1} parent=1 // pred_fallthru
      _
    // Predicated region
    $region22: #{edge_conv_batch_forward.1} parent=1 // pred_check
      _
    $region23: #{edge_conv_batch_forward.1} parent=1 // pred_check_branch
      %26 = sbr.rel (0) target = $region25
    $region24: #{edge_conv_batch_forward.1} parent=1 // pred_region
      _
    $region25: #{edge_conv_batch_forward.1} parent=1 // pred_fallthru
      _
    %v27 = vld [vmem:[%s0] sm:$0xff]
    %v28 = vld [vmem:[%s1] sm:$0xff]
    %v29 = vld [vmem:[%s1 + $0x8] sm:$0xff]
    %v30 = vlaneseq
    %v31 = vand.u32 %v30, 127
    %v32 = vld [vmem:[%s2] sm:$0xff]
    %v33 = vld [vmem:[%s2 + $0x8] sm:$0xff]
    %v34 = vld [vmem:[%s2 + $0x10] sm:$0xff]
    %v35 = vld [vmem:[%s2 + $0x18] sm:$0xff]
    %36 = vset.pattern.permute.xlu0 0
    %37 = vperm.xlu0 %36, %v32
    %v38 = vpop.permute.xlu0 %37
    %39 = vset.pattern.permute.xlu0 0
    %40 = vperm.xlu0 %39, %v33
    %v41 = vpop.permute.xlu0 %40
    %vm42 = vcmp.eq.s32.totalorder %v31, %v38
    %vm43 = vcmp.eq.s32.totalorder %v31, %v41
    %v44 = vsel %vm42, 1, 0
    %v45 = vsel %vm43, 1, 0
    %v46 = vcvt.s32.f32 %v44
    %v47 = vcvt.s32.f32 %v45
    %48 = vset.pattern.permute.xlu0 0
    %49 = vperm.xlu0 %48, %v34
    %v50 = vpop.permute.xlu0 %49
    %51 = vset.pattern.permute.xlu0 0
    %52 = vperm.xlu0 %51, %v35
    %v53 = vpop.permute.xlu0 %52
    %vm54 = vcmp.eq.s32.totalorder %v31, %v50
    %vm55 = vcmp.eq.s32.totalorder %v31, %v53
    %v56 = vsel %vm54, 1, 0
    %v57 = vsel %vm55, 1, 0
    %v58 = vcvt.s32.f32 %v56
    %v59 = vcvt.s32.f32 %v57
    %vm60 = vcmask 64512
    %v62 = vsel %vm60, %v46, 0
    %v65 = vsel %vm60, %v47, 0
    %67 = vmatpush.msra.mxu0 0.0
    %68 = vmatpush.msra.mxu0 0.0
    %69 = vmatpush.msra.mxu0 0.0
    %70 = vmatpush.msra.mxu0 0.0
    %71 = vmatpush.msra.mxu0 0.0
    %72 = vmatpush.msra.mxu0 0.0
    %73 = vmatpush.msra.mxu0 0.0
    %74 = vmatpush.msra.mxu0 0.0
    %75 = vmatpush.msra.mxu0 0.0
    %76 = vmatpush.msra.mxu0 0.0
    %77 = vmatpush.msra.mxu0 0.0
    %78 = vmatpush.msra.mxu0 0.0
    %79 = vmatpush.msra.mxu0 0.0
    %80 = vmatpush.msra.mxu0 0.0
    %81 = vmatpush.msra.mxu0 0.0
    %82 = vmatpush.msra.mxu0 %v27
    %83 = vmatmul.f32.gmra.mxu0 %v62
    %v84 = vpop.f32.mrf.mxu0
    %v85 = vadd.f32 0.0, %v84
    %86 = vmatmul.f32.gmra.mxu0 %v65
    %v87 = vpop.f32.mrf.mxu0
    %v88 = vadd.f32 0.0, %v87
    %89 = vdwg.mxu0
    %v91 = vsel %vm60, %v58, 0
    %v94 = vsel %vm60, %v59, 0
    %96 = vmatpush.msra.mxu0 0.0
    %97 = vmatpush.msra.mxu0 0.0
    %98 = vmatpush.msra.mxu0 0.0
    %99 = vmatpush.msra.mxu0 0.0
    %100 = vmatpush.msra.mxu0 0.0
    %101 = vmatpush.msra.mxu0 0.0
    %102 = vmatpush.msra.mxu0 0.0
    %103 = vmatpush.msra.mxu0 0.0
    %104 = vmatpush.msra.mxu0 0.0
    %105 = vmatpush.msra.mxu0 0.0
    %106 = vmatpush.msra.mxu0 0.0
    %107 = vmatpush.msra.mxu0 0.0
    %108 = vmatpush.msra.mxu0 0.0
    %109 = vmatpush.msra.mxu0 0.0
    %110 = vmatpush.msra.mxu0 0.0
    %111 = vmatpush.msra.mxu0 %v27
    %112 = vmatmul.f32.gmra.mxu0 %v91
    %v113 = vpop.f32.mrf.mxu0
    %v114 = vadd.f32 0.0, %v113
    %115 = vmatmul.f32.gmra.mxu0 %v94
    %v116 = vpop.f32.mrf.mxu0
    %v117 = vadd.f32 0.0, %v116
    %118 = vdwg.mxu0
    %v119 = vld [vmem:[%s3] sm:$0xff]
    %v120 = vld [vmem:[%s3 + $0x8] sm:$0xff]
    %v121 = vld [vmem:[%s3 + $0x10] sm:$0xff]
    %v122 = vld [vmem:[%s3 + $0x18] sm:$0xff]
    %v123 = vld [vmem:[%s3 + $0x20] sm:$0xff]
    %v124 = vld [vmem:[%s3 + $0x28] sm:$0xff]
    %v125 = vld [vmem:[%s3 + $0x30] sm:$0xff]
    %v126 = vld [vmem:[%s3 + $0x38] sm:$0xff]
    %vm127 = vcmask 261120
    %v129 = vsel %vm127, %v114, 0
    %v132 = vsel %vm127, %v117, 0
    %134 = vmatpush.msra.mxu0 0.0
    %135 = vmatpush.msra.mxu0 0.0
    %136 = vmatpush.msra.mxu0 0.0
    %137 = vmatpush.msra.mxu0 0.0
    %138 = vmatpush.msra.mxu0 0.0
    %139 = vmatpush.msra.mxu0 0.0
    %140 = vmatpush.msra.mxu0 0.0
    %141 = vmatpush.msra.mxu0 0.0
    %142 = vmatpush.msra.mxu0 0.0
    %143 = vmatpush.msra.mxu0 0.0
    %144 = vmatpush.msra.mxu0 0.0
    %145 = vmatpush.msra.mxu0 0.0
    %146 = vmatpush.msra.mxu0 %v126
    %147 = vmatpush.msra.mxu0 %v125
    %148 = vmatpush.msra.mxu0 %v124
    %149 = vmatpush.msra.mxu0 %v123
    %150 = vmatmul.f32.gmra.mxu0 %v129
    %v151 = vpop.f32.mrf.mxu0
    %v152 = vadd.f32 0.0, %v151
    %153 = vmatmul.f32.gmra.mxu0 %v132
    %v154 = vpop.f32.mrf.mxu0
    %v155 = vadd.f32 0.0, %v154
    %156 = vdwg.mxu0
    %v158 = vsel %vm127, %v85, 0
    %v161 = vsel %vm127, %v88, 0
    %163 = vmatpush.msra.mxu0 0.0
    %164 = vmatpush.msra.mxu0 0.0
    %165 = vmatpush.msra.mxu0 0.0
    %166 = vmatpush.msra.mxu0 0.0
    %167 = vmatpush.msra.mxu0 0.0
    %168 = vmatpush.msra.mxu0 0.0
    %169 = vmatpush.msra.mxu0 0.0
    %170 = vmatpush.msra.mxu0 0.0
    %171 = vmatpush.msra.mxu0 0.0
    %172 = vmatpush.msra.mxu0 0.0
    %173 = vmatpush.msra.mxu0 0.0
    %174 = vmatpush.msra.mxu0 0.0
    %175 = vmatpush.msra.mxu0 %v122
    %176 = vmatpush.msra.mxu0 %v121
    %177 = vmatpush.msra.mxu0 %v120
    %178 = vmatpush.msra.mxu0 %v119
    %179 = vmatmul.f32.gmra.mxu0 %v158
    %v180 = vpop.f32.mrf.mxu0
    %v181 = vadd.f32 %v152, %v180
    %182 = vmatmul.f32.gmra.mxu0 %v161
    %v183 = vpop.f32.mrf.mxu0
    %v184 = vadd.f32 %v155, %v183
    %185 = vdwg.mxu0
    %v186 = vld [vmem:[%s3 + $0x40] sm:$0xff]
    %v187 = vld [vmem:[%s3 + $0x48] sm:$0xff]
    %v188 = vld [vmem:[%s3 + $0x50] sm:$0xff]
    %v189 = vld [vmem:[%s3 + $0x58] sm:$0xff]
    %v191 = vsel %vm127, %v28, 0
    %v194 = vsel %vm127, %v29, 0
    %196 = vmatpush.msra.mxu0 0.0
    %197 = vmatpush.msra.mxu0 0.0
    %198 = vmatpush.msra.mxu0 0.0
    %199 = vmatpush.msra.mxu0 0.0
    %200 = vmatpush.msra.mxu0 0.0
    %201 = vmatpush.msra.mxu0 0.0
    %202 = vmatpush.msra.mxu0 0.0
    %203 = vmatpush.msra.mxu0 0.0
    %204 = vmatpush.msra.mxu0 0.0
    %205 = vmatpush.msra.mxu0 0.0
    %206 = vmatpush.msra.mxu0 0.0
    %207 = vmatpush.msra.mxu0 0.0
    %208 = vmatpush.msra.mxu0 %v189
    %209 = vmatpush.msra.mxu0 %v188
    %210 = vmatpush.msra.mxu0 %v187
    %211 = vmatpush.msra.mxu0 %v186
    %212 = vmatmul.f32.gmra.mxu0 %v191
    %v213 = vpop.f32.mrf.mxu0
    %v214 = vadd.f32 0.0, %v213
    %215 = vmatmul.f32.gmra.mxu0 %v194
    %v216 = vpop.f32.mrf.mxu0
    %v217 = vadd.f32 0.0, %v216
    %218 = vdwg.mxu0
    %v219 = vadd.f32 %v181, %v214
    %v220 = vadd.f32 %v184, %v217
    %v221 = vld [vmem:[%s5] sm:$0x1]
    %v222 = vperm.slane %v221, 0
    %v223 = vadd.f32 %v219, %v222
    %v224 = vadd.f32 %v220, %v222
    %v225 = vmax.f32 %v223, 0.0
    %v226 = vmax.f32 %v224, 0.0
    %227 = vxpose.xlu0.b32.start [1/16] %v58, 128
    %228 = vxpose.xlu0.b32.cont [2/16] %v59, 128
    %229 = vxpose.xlu0.b32.cont [3/16] 0.0, 128
    %230 = vxpose.xlu0.b32.cont [4/16] 0.0, 128
    %231 = vxpose.xlu0.b32.cont [5/16] 0.0, 128
    %232 = vxpose.xlu0.b32.cont [6/16] 0.0, 128
    %233 = vxpose.xlu0.b32.cont [7/16] 0.0, 128
    %234 = vxpose.xlu0.b32.cont [8/16] 0.0, 128
    %235 = vxpose.xlu0.b32.cont [9/16] 0.0, 128
    %236 = vxpose.xlu0.b32.cont [10/16] 0.0, 128
    %237 = vxpose.xlu0.b32.cont [11/16] 0.0, 128
    %238 = vxpose.xlu0.b32.cont [12/16] 0.0, 128
    %239 = vxpose.xlu0.b32.cont [13/16] 0.0, 128
    %240 = vxpose.xlu0.b32.cont [14/16] 0.0, 128
    %241 = vxpose.xlu0.b32.cont [15/16] 0.0, 128
    %242 = vxpose.xlu0.b32.end [16/16] 0.0, 128
    %v243 = vpop.trf.xlu0
    %v244 = vpop.trf.xlu0
    %v245 = vpop.trf.xlu0
    %v246 = vpop.trf.xlu0
    %v247 = vpop.trf.xlu0
    %v248 = vpop.trf.xlu0
    %v249 = vpop.trf.xlu0
    %v250 = vpop.trf.xlu0
    %v251 = vpop.trf.xlu0
    %v252 = vpop.trf.xlu0
    %v253 = vpop.trf.xlu0
    %v254 = vpop.trf.xlu0
    %v255 = vpop.trf.xlu0
    %v256 = vpop.trf.xlu0
    %v257 = vpop.trf.xlu0
    %v258 = vpop.trf.xlu0
    %vm259 = vcmask 130048
    %v261 = vsel %vm259, %v243, 0
    %263 = vmatpush.msra.mxu0 0.0
    %264 = vmatpush.msra.mxu0 0.0
    %265 = vmatpush.msra.mxu0 0.0
    %266 = vmatpush.msra.mxu0 0.0
    %267 = vmatpush.msra.mxu0 0.0
    %268 = vmatpush.msra.mxu0 0.0
    %269 = vmatpush.msra.mxu0 0.0
    %270 = vmatpush.msra.mxu0 0.0
    %271 = vmatpush.msra.mxu0 0.0
    %272 = vmatpush.msra.mxu0 0.0
    %273 = vmatpush.msra.mxu0 0.0
    %274 = vmatpush.msra.mxu0 0.0
    %275 = vmatpush.msra.mxu0 0.0
    %276 = vmatpush.msra.mxu0 0.0
    %277 = vmatpush.msra.mxu0 %v226
    %278 = vmatpush.msra.mxu0 %v225
    %279 = vmatmul.f32.gmra.mxu0 %v261
    %v280 = vpop.f32.mrf.mxu0
    %v281 = vadd.f32 0.0, %v280
    %282 = vdwg.mxu0
    %v283 = vld [vmem:[%s4] sm:$0xff]
    %v284 = vld [vmem:[%s4 + $0x8] sm:$0xff]
    %v285 = vld [vmem:[%s4 + $0x10] sm:$0xff]
    %v286 = vld [vmem:[%s4 + $0x18] sm:$0xff]
    %v287 = vld [vmem:[%s4 + $0x20] sm:$0xff]
    %v288 = vld [vmem:[%s4 + $0x28] sm:$0xff]
    %v289 = vld [vmem:[%s4 + $0x30] sm:$0xff]
    %v290 = vld [vmem:[%s4 + $0x38] sm:$0xff]
    %v292 = vsel %vm127, %v281, 0
    %294 = vmatpush.msra.mxu0 0.0
    %295 = vmatpush.msra.mxu0 0.0
    %296 = vmatpush.msra.mxu0 0.0
    %297 = vmatpush.msra.mxu0 0.0
    %298 = vmatpush.msra.mxu0 0.0
    %299 = vmatpush.msra.mxu0 0.0
    %300 = vmatpush.msra.mxu0 0.0
    %301 = vmatpush.msra.mxu0 0.0
    %302 = vmatpush.msra.mxu0 0.0
    %303 = vmatpush.msra.mxu0 0.0
    %304 = vmatpush.msra.mxu0 0.0
    %305 = vmatpush.msra.mxu0 0.0
    %306 = vmatpush.msra.mxu0 %v290
    %307 = vmatpush.msra.mxu0 %v289
    %308 = vmatpush.msra.mxu0 %v288
    %309 = vmatpush.msra.mxu0 %v287
    %310 = vmatmul.f32.gmra.mxu0 %v292
    %v311 = vpop.f32.mrf.mxu0
    %v312 = vadd.f32 0.0, %v311
    %313 = vdwg.mxu0
    %v315 = vsel %vm127, %v27, 0
    %317 = vmatpush.msra.mxu0 0.0
    %318 = vmatpush.msra.mxu0 0.0
    %319 = vmatpush.msra.mxu0 0.0
    %320 = vmatpush.msra.mxu0 0.0
    %321 = vmatpush.msra.mxu0 0.0
    %322 = vmatpush.msra.mxu0 0.0
    %323 = vmatpush.msra.mxu0 0.0
    %324 = vmatpush.msra.mxu0 0.0
    %325 = vmatpush.msra.mxu0 0.0
    %326 = vmatpush.msra.mxu0 0.0
    %327 = vmatpush.msra.mxu0 0.0
    %328 = vmatpush.msra.mxu0 0.0
    %329 = vmatpush.msra.mxu0 %v286
    %330 = vmatpush.msra.mxu0 %v285
    %331 = vmatpush.msra.mxu0 %v284
    %332 = vmatpush.msra.mxu0 %v283
    %333 = vmatmul.f32.gmra.mxu0 %v315
    %v334 = vpop.f32.mrf.mxu0
    %v335 = vadd.f32 %v312, %v334
    %336 = vdwg.mxu0
    %v337 = vld [vmem:[%s5 + $0x1] sm:$0x1]
    %v338 = vperm.slane %v337, 0
    %v339 = vadd.f32 %v335, %v338
    %v340 = vmax.f32 %v339, 0.0
    %v341 = vld [vmem:[%s5 + $0x2] sm:$0x1]
    %v342 = vld [vmem:[%s5 + $0x3] sm:$0x1]
    %v343 = vsel %vm127, %v225, 0.0
    %344 = vadd.xlane.f32.xlu0 %v343
    %v345 = vpop.xlane.xlu0 %344
    %v346 = vsel %vm127, %v226, 0.0
    %347 = vadd.xlane.f32.xlu0 %v346
    %v348 = vpop.xlane.xlu0 %347
    %v349 = vrcp.pop 32.0
    %v350 = vmul.f32 32.0, %v349
    %v351 = vsub.f32 1.0, %v350
    %v352 = vmul.f32 %v349, %v351
    %v353 = vadd.f32 %v349, %v352
    %vm354 = vweird.f32 %v349
    %v355 = vsel %vm354, %v349, %v353
    %v356 = vmul.f32 %v345, %v355
    %v357 = vmul.f32 %v348, %v355
    %v358 = vsub.f32 %v225, %v356
    %v359 = vsub.f32 %v226, %v357
    %v360 = vmul.f32 %v358, %v358
    %v361 = vmul.f32 %v359, %v359
    %v362 = vsel %vm127, %v360, 0.0
    %363 = vadd.xlane.f32.xlu0 %v362
    %v364 = vpop.xlane.xlu0 %363
    %v365 = vsel %vm127, %v361, 0.0
    %366 = vadd.xlane.f32.xlu0 %v365
    %v367 = vpop.xlane.xlu0 %366
    %v368 = vmul.f32 %v364, %v355
    %v369 = vmul.f32 %v367, %v355
    %v370 = vadd.f32 %v368, 1e-05
    %v371 = vadd.f32 %v369, 1e-05
    %v372 = vrsqrt.pop %v370
    %v373 = vmul.f32 %v372, %v370
    %v374 = vmul.f32 %v373, %v372
    %v375 = vmul.f32 0.5, %v374
    %v376 = vsub.f32 1.5, %v375
    %v377 = vmul.f32 %v372, %v376
    %vm378 = vweird.f32 %v370
    %vm379 = vweird.f32 %v372
    %vm380 = vmor %vm378, %vm379
    %v381 = vsel %vm380, %v372, %v377
    %v382 = vrsqrt.pop %v371
    %v383 = vmul.f32 %v382, %v371
    %v384 = vmul.f32 %v383, %v382
    %v385 = vmul.f32 0.5, %v384
    %v386 = vsub.f32 1.5, %v385
    %v387 = vmul.f32 %v382, %v386
    %vm388 = vweird.f32 %v371
    %vm389 = vweird.f32 %v382
    %vm390 = vmor %vm388, %vm389
    %v391 = vsel %vm390, %v382, %v387
    %v392 = vmul.f32 %v358, %v381
    %v393 = vmul.f32 %v359, %v391
    %v394 = vperm.slane %v341, 0
    %v395 = vmul.f32 %v392, %v394
    %v396 = vmul.f32 %v393, %v394
    %v397 = vperm.slane %v342, 0
    %v398 = vadd.f32 %v395, %v397
    %v399 = vadd.f32 %v396, %v397
    %400 = vst.msk [vmem:[#allocation4] sm:$0xff] %vm127, %v398
    %401 = vst.msk [vmem:[#allocation4 + $0x8] sm:$0xff] %vm127, %v399
    %v402 = vld [vmem:[%s5 + $0x4] sm:$0x1]
    %v403 = vld [vmem:[%s5 + $0x5] sm:$0x1]
    %v404 = vsel %vm127, %v340, 0.0
    %405 = vadd.xlane.f32.xlu0 %v404
    %v406 = vpop.xlane.xlu0 %405
    %v407 = vmul.f32 %v406, %v355
    %v408 = vsub.f32 %v340, %v407
    %v409 = vmul.f32 %v408, %v408
    %v410 = vsel %vm127, %v409, 0.0
    %411 = vadd.xlane.f32.xlu0 %v410
    %v412 = vpop.xlane.xlu0 %411
    %v413 = vmul.f32 %v412, %v355
    %v414 = vadd.f32 %v413, 1e-05
    %v415 = vrsqrt.pop %v414
    %v416 = vmul.f32 %v415, %v414
    %v417 = vmul.f32 %v416, %v415
    %v418 = vmul.f32 0.5, %v417
    %v419 = vsub.f32 1.5, %v418
    %v420 = vmul.f32 %v415, %v419
    %vm421 = vweird.f32 %v414
    %vm422 = vweird.f32 %v415
    %vm423 = vmor %vm421, %vm422
    %v424 = vsel %vm423, %v415, %v420
    %v425 = vmul.f32 %v408, %v424
    %v426 = vperm.slane %v402, 0
    %v427 = vmul.f32 %v425, %v426
    %v428 = vperm.slane %v403, 0
    %v429 = vadd.f32 %v427, %v428
    %430 = vst.msk [vmem:[#allocation2] sm:$0xff] %vm127, %v429
    // Predicated region
    $region26: #{edge_conv_batch_forward.1} parent=1 // pred_check
      _
    $region27: #{edge_conv_batch_forward.1} parent=1 // pred_check_branch
      %432 = sbr.rel (0) target = $region29
    $region28: #{edge_conv_batch_forward.1} parent=1 // pred_region
      %434 = vsyncadd [#allocation3], 0
      %s436 = sshll.u32 [#allocation2], 4
      %s437 = int_to_ptr.vmem [resolvable:$true] %s436
      %s438 = sshll.u32 %s6, 4
      %s439 = int_to_ptr.hbm [resolvable:$true] %s438
      %441 = dma.vmem_to_hbm [thread:$0]  %s437, 128, %s439, [#allocation3]
    $region29: #{edge_conv_batch_forward.1} parent=1 // pred_fallthru
      _
    // Predicated region
    $region30: #{edge_conv_batch_forward.1} parent=1 // pred_check
      _
    $region31: #{edge_conv_batch_forward.1} parent=1 // pred_check_branch
      %443 = sbr.rel (0) target = $region33
    $region32: #{edge_conv_batch_forward.1} parent=1 // pred_region
      %445 = vsyncadd [#allocation5], 0
      %s446 = sshll.u32 [#allocation4], 4
      %s447 = int_to_ptr.vmem [resolvable:$true] %s446
      %s448 = sshll.u32 %s7, 4
      %s449 = int_to_ptr.hbm [resolvable:$true] %s448
      %454 = dma.vmem_to_hbm [thread:$0]  %s447, 256, %s449, [#allocation5], 128, 128, 8
    $region33: #{edge_conv_batch_forward.1} parent=1 // pred_fallthru
      _
    // Predicated region
    $region34: #{edge_conv_batch_forward.1} parent=1 // pred_check
      _
    $region35: #{edge_conv_batch_forward.1} parent=1 // pred_check_branch
      %456 = sbr.rel (0) target = $region37
    $region36: #{edge_conv_batch_forward.1} parent=1 // pred_region
      %458 = dma.done [#allocation3], 128
    $region37: #{edge_conv_batch_forward.1} parent=1 // pred_fallthru
      _
    // Predicated region
    $region38: #{edge_conv_batch_forward.1} parent=1 // pred_check
      _
    $region39: #{edge_conv_batch_forward.1} parent=1 // pred_check_branch
      %460 = sbr.rel (0) target = $region41
    $region40: #{edge_conv_batch_forward.1} parent=1 // pred_region
      %462 = dma.done [#allocation5], 256
    $region41: #{edge_conv_batch_forward.1} parent=1 // pred_fallthru
      _
    %463 = vsyncpa [#allocation3], 1
    %464 = vsyncpa [#allocation5], 1

</llo_original>
